<compile_context>
chip_gen: v6e
topology: v6e:2x2x1
jax: 0.10.0
libtpu: 0.0.40
codegen_flags: <defaults>
</compile_context>

<pallas_src>
import jax
import jax.numpy as jnp
from jax.experimental import pallas as pl
from jax.experimental.pallas import tpu as pltpu


# ----------------------------- Pallas kernel --------------------------------

def _projection_head_kernel(x_ref, w1_ref, b1_ref, w2_ref, b2_ref, w3_ref, b3_ref, o_ref):
    # x:  [TB, 1000] f32      w1: [1000, 64] f32   b1: [1, 64] f32
    # w2: [64, 32]   f32      b2: [1, 32]   f32
    # w3: [32, 16]   f32      b3: [1, 16]   f32
    # o:  [TB, 16]   f32
    h = jnp.dot(x_ref[...], w1_ref[...], preferred_element_type=jnp.float32)
    h = jnp.maximum(h + b1_ref[...], 0.0)
    h = jnp.dot(h, w2_ref[...], preferred_element_type=jnp.float32)
    h = jnp.maximum(h + b2_ref[...], 0.0)
    o_ref[...] = (
        jnp.dot(h, w3_ref[...], preferred_element_type=jnp.float32) + b3_ref[...]
    )


# ------------------------------ Wrappers --------------------------------------

def prepare_params(params):
    """One-time parameter prep (do this at init, not per forward call)."""
    return {
        "w1": params["w1"].astype(jnp.float32),
        "b1": params["b1"].reshape(1, -1).astype(jnp.float32),
        "w2": params["w2"].astype(jnp.float32),
        "b2": params["b2"].reshape(1, -1).astype(jnp.float32),
        "w3": params["w3"].astype(jnp.float32),
        "b3": params["b3"].reshape(1, -1).astype(jnp.float32),
    }


def _pick_tile_b(B):
    """Batch-row tile: (8,128)-aligned, capped so f32 tiles fit v5e's 16 MiB
    scoped VMEM, and split so v7x's 2 TensorCores both get work for B > 8."""
    if B <= 8:
        return B                      # single tile; block equals full array dim
    half = -(-B // 2)                 # ceil(B / 2)  -> >=2 grid tiles when possible
    half = ((half + 7) // 8) * 8      # keep sublane (8) alignment
    return min(1024, half)


def projection_head_forward(x, prepared, *, tile_b=None):
    """x: [B, 1000] float32 -> [B, 16] float32 (PyTorch ProjectionHead forward)."""
    w1, b1 = prepared["w1"], prepared["b1"]
    w2, b2 = prepared["w2"], prepared["b2"]
    w3, b3 = prepared["w3"], prepared["b3"]

    B, din = x.shape
    h1 = w1.shape[1]
    h2 = w2.shape[1]
    dout = w3.shape[1]

    if tile_b is None:
        tile_b = _pick_tile_b(B)

    grid = (pl.cdiv(B, tile_b),)

    return pl.pallas_call(
        _projection_head_kernel,
        out_shape=jax.ShapeDtypeStruct((B, dout), jnp.float32),
        grid=grid,
        in_specs=[
            pl.BlockSpec((tile_b, din), lambda i: (i, 0)),  # x tile (pipelined)
            pl.BlockSpec((din, h1), lambda i: (0, 0)),      # W1 (resident)
            pl.BlockSpec((1, h1), lambda i: (0, 0)),        # b1
            pl.BlockSpec((h1, h2), lambda i: (0, 0)),       # W2 (resident)
            pl.BlockSpec((1, h2), lambda i: (0, 0)),        # b2
            pl.BlockSpec((h2, dout), lambda i: (0, 0)),     # W3 (resident)
            pl.BlockSpec((1, dout), lambda i: (0, 0)),      # b3
        ],
        out_specs=pl.BlockSpec((tile_b, dout), lambda i: (i, 0)),
        compiler_params=pltpu.CompilerParams(
            # Independent batch tiles -> shard across v7x's 2 TensorCores.
            dimension_semantics=("parallel",),
        ),
    )(x.astype(jnp.float32), w1, b1, w2, b2, w3, b3)


# -------------------------- Pure-JAX reference --------------------------------

def projection_head_ref(x, params):
    h = jnp.maximum(x @ params["w1"] + params["b1"], 0.0)
    h = jnp.maximum(h @ params["w2"] + params["b2"], 0.0)
    return h @ params["w3"] + params["b3"]


# ------------------------------- Main -----------------------------------------

if __name__ == "__main__":
    B, DIN, H1, H2, DOUT = 2, 1000, 64, 32, 16

    key = jax.random.PRNGKey(0)
    k_x, k_w1, k_b1, k_w2, k_b2, k_w3, k_b3 = jax.random.split(key, 7)

    x = jax.random.normal(k_x, (B, DIN), dtype=jnp.float32)
    params = {
        "w1": jax.random.normal(k_w1, (DIN, H1), jnp.float32) * (DIN ** -0.5),
        "b1": jax.random.normal(k_b1, (H1,), jnp.float32) * 0.01,
        "w2": jax.random.normal(k_w2, (H1, H2), jnp.float32) * (H1 ** -0.5),
        "b2": jax.random.normal(k_b2, (H2,), jnp.float32) * 0.01,
        "w3": jax.random.normal(k_w3, (H2, DOUT), jnp.float32) * (H2 ** -0.5),
        "b3": jax.random.normal(k_b3, (DOUT,), jnp.float32) * 0.01,
    }

    prepared = prepare_params(params)  # one-time prep, not per-call

    out = jax.block_until_ready(projection_head_forward(x, prepared))
    ref = jax.block_until_ready(projection_head_ref(x, params))

    assert out.shape == (B, DOUT), out.shape
    # f32 throughout -> tight tolerance vs the f32 reference.
    assert jnp.allclose(out, ref, atol=1e-4, rtol=1e-4), "mismatch vs JAX reference"
    print("KERNEL_OK")
</pallas_src>

<mosaic_0001>
module attributes {stable_mosaic.version = 11 : i64} {
  func.func @_projection_head_kernel(%arg0: i32, %arg1: memref<2x1000xf32, #tpu.memory_space<vmem>>, %arg2: memref<1000x64xf32, #tpu.memory_space<vmem>>, %arg3: memref<1x64xf32, #tpu.memory_space<vmem>>, %arg4: memref<64x32xf32, #tpu.memory_space<vmem>>, %arg5: memref<1x32xf32, #tpu.memory_space<vmem>>, %arg6: memref<32x16xf32, #tpu.memory_space<vmem>>, %arg7: memref<1x16xf32, #tpu.memory_space<vmem>>, %arg8: memref<2x16xf32, #tpu.memory_space<vmem>>) attributes {dimension_semantics = [#tpu.dimension_semantics<parallel>], iteration_bounds = array<i64: 1>, scalar_prefetch = 0 : i64, scratch_operands = 0 : i64, tpu.core_type = #tpu.core_type<tc>, window_params = [{transform_indices = @transform_0, window_bounds = array<i64: 2, 1000>}, {pipeline_mode = #tpu.pipeline_mode<synchronous>, transform_indices = @transform_1, window_bounds = array<i64: 1000, 64>}, {pipeline_mode = #tpu.pipeline_mode<synchronous>, transform_indices = @transform_2, window_bounds = array<i64: 1, 64>}, {pipeline_mode = #tpu.pipeline_mode<synchronous>, transform_indices = @transform_3, window_bounds = array<i64: 64, 32>}, {pipeline_mode = #tpu.pipeline_mode<synchronous>, transform_indices = @transform_4, window_bounds = array<i64: 1, 32>}, {pipeline_mode = #tpu.pipeline_mode<synchronous>, transform_indices = @transform_5, window_bounds = array<i64: 32, 16>}, {pipeline_mode = #tpu.pipeline_mode<synchronous>, transform_indices = @transform_6, window_bounds = array<i64: 1, 16>}, {transform_indices = @transform_7, window_bounds = array<i64: 2, 16>}]} {
    %c0 = arith.constant 0 : index
    %c0_0 = arith.constant 0 : index
    %0 = vector.load %arg1[%c0, %c0_0] : memref<2x1000xf32, #tpu.memory_space<vmem>>, vector<2x1000xf32>
    %c0_1 = arith.constant 0 : index
    %c0_2 = arith.constant 0 : index
    %1 = vector.load %arg2[%c0_1, %c0_2] : memref<1000x64xf32, #tpu.memory_space<vmem>>, vector<1000x64xf32>
    %cst = arith.constant dense<0.000000e+00> : vector<2x64xf32>
    %2 = tpu.matmul %0, %1, %cst {dimension_numbers = #tpu.dot_dimension_numbers<[1], [0], [0], [1], [0, 0, 1, 1], [], []>} : vector<2x1000xf32>, vector<1000x64xf32>, vector<2x64xf32> -> vector<2x64xf32>
    %c0_3 = arith.constant 0 : index
    %c0_4 = arith.constant 0 : index
    %3 = vector.load %arg3[%c0_3, %c0_4] : memref<1x64xf32, #tpu.memory_space<vmem>>, vector<1x64xf32>
    %4 = vector.broadcast %3 : vector<1x64xf32> to vector<2x64xf32>
    %5 = arith.addf %2, %4 : vector<2x64xf32>
    %cst_5 = arith.constant 0.000000e+00 : f32
    %6 = vector.broadcast %cst_5 : f32 to vector<2x64xf32>
    %7 = arith.maximumf %5, %6 : vector<2x64xf32>
    %c0_6 = arith.constant 0 : index
    %c0_7 = arith.constant 0 : index
    %8 = vector.load %arg4[%c0_6, %c0_7] : memref<64x32xf32, #tpu.memory_space<vmem>>, vector<64x32xf32>
    %cst_8 = arith.constant dense<0.000000e+00> : vector<2x32xf32>
    %9 = tpu.matmul %7, %8, %cst_8 {dimension_numbers = #tpu.dot_dimension_numbers<[1], [0], [0], [1], [0, 0, 1, 1], [], []>} : vector<2x64xf32>, vector<64x32xf32>, vector<2x32xf32> -> vector<2x32xf32>
    %c0_9 = arith.constant 0 : index
    %c0_10 = arith.constant 0 : index
    %10 = vector.load %arg5[%c0_9, %c0_10] : memref<1x32xf32, #tpu.memory_space<vmem>>, vector<1x32xf32>
    %11 = vector.broadcast %10 : vector<1x32xf32> to vector<2x32xf32>
    %12 = arith.addf %9, %11 : vector<2x32xf32>
    %cst_11 = arith.constant 0.000000e+00 : f32
    %13 = vector.broadcast %cst_11 : f32 to vector<2x32xf32>
    %14 = arith.maximumf %12, %13 : vector<2x32xf32>
    %c0_12 = arith.constant 0 : index
    %c0_13 = arith.constant 0 : index
    %15 = vector.load %arg6[%c0_12, %c0_13] : memref<32x16xf32, #tpu.memory_space<vmem>>, vector<32x16xf32>
    %cst_14 = arith.constant dense<0.000000e+00> : vector<2x16xf32>
    %16 = tpu.matmul %14, %15, %cst_14 {dimension_numbers = #tpu.dot_dimension_numbers<[1], [0], [0], [1], [0, 0, 1, 1], [], []>} : vector<2x32xf32>, vector<32x16xf32>, vector<2x16xf32> -> vector<2x16xf32>
    %c0_15 = arith.constant 0 : index
    %c0_16 = arith.constant 0 : index
    %17 = vector.load %arg7[%c0_15, %c0_16] : memref<1x16xf32, #tpu.memory_space<vmem>>, vector<1x16xf32>
    %18 = vector.broadcast %17 : vector<1x16xf32> to vector<2x16xf32>
    %19 = arith.addf %16, %18 : vector<2x16xf32>
    %c0_17 = arith.constant 0 : index
    %c0_18 = arith.constant 0 : index
    %20 = vector.load %arg8[%c0_17, %c0_18] : memref<2x16xf32, #tpu.memory_space<vmem>>, vector<2x16xf32>
    tpu.vector_store %arg8[%c0_17, %c0_18], %19 {strides = array<i32>} : memref<2x16xf32, #tpu.memory_space<vmem>>, vector<2x16xf32>,
    return
  }
  func.func @transform_0(%arg0: i32) -> (i32, i32) {
    %c0_i32 = arith.constant 0 : i32
    %c0_i32_0 = arith.constant 0 : i32
    return %arg0, %c0_i32 : i32, i32
  }
  func.func @transform_1(%arg0: i32) -> (i32, i32) {
    %c0_i32 = arith.constant 0 : i32
    %c0_i32_0 = arith.constant 0 : i32
    %c0_i32_1 = arith.constant 0 : i32
    return %c0_i32, %c0_i32_0 : i32, i32
  }
  func.func @transform_2(%arg0: i32) -> (i32, i32) {
    %c0_i32 = arith.constant 0 : i32
    %c0_i32_0 = arith.constant 0 : i32
    %c0_i32_1 = arith.constant 0 : i32
    return %c0_i32, %c0_i32_0 : i32, i32
  }
  func.func @transform_3(%arg0: i32) -> (i32, i32) {
    %c0_i32 = arith.constant 0 : i32
    %c0_i32_0 = arith.constant 0 : i32
    %c0_i32_1 = arith.constant 0 : i32
    return %c0_i32, %c0_i32_0 : i32, i32
  }
  func.func @transform_4(%arg0: i32) -> (i32, i32) {
    %c0_i32 = arith.constant 0 : i32
    %c0_i32_0 = arith.constant 0 : i32
    %c0_i32_1 = arith.constant 0 : i32
    return %c0_i32, %c0_i32_0 : i32, i32
  }
  func.func @transform_5(%arg0: i32) -> (i32, i32) {
    %c0_i32 = arith.constant 0 : i32
    %c0_i32_0 = arith.constant 0 : i32
    %c0_i32_1 = arith.constant 0 : i32
    return %c0_i32, %c0_i32_0 : i32, i32
  }
  func.func @transform_6(%arg0: i32) -> (i32, i32) {
    %c0_i32 = arith.constant 0 : i32
    %c0_i32_0 = arith.constant 0 : i32
    %c0_i32_1 = arith.constant 0 : i32
    return %c0_i32, %c0_i32_0 : i32, i32
  }
  func.func @transform_7(%arg0: i32) -> (i32, i32) {
    %c0_i32 = arith.constant 0 : i32
    %c0_i32_0 = arith.constant 0 : i32
    return %arg0, %c0_i32 : i32, i32
  }
}

</mosaic_0001>

<llo_original>
// kernel: tpu_custom_call.1
$region0: #{tpu_custom_call.1}
  #allocation0 [shape = 'u32[]', space=smem, size = 0x4, offset = 0x4, fixed_abs, tag = 'smem constant byte address 0x4 - core index']
  #allocation1 [shape = 'u32[144,128]{1,0:T(1,128)}', space=vmem, size = 0x12000, scoped, tag = 'internal scratch']
  %s0 = inlined_call_operand.vmem [shape: f32[2,1000], index: 0, kind: input, shape index: {}]
  %s1 = inlined_call_operand.vmem [shape: f32[1000,64], index: 1, kind: input, shape index: {}]
  %s2 = inlined_call_operand.vmem [shape: f32[1,64], index: 2, kind: input, shape index: {}]
  %s3 = inlined_call_operand.vmem [shape: f32[64,32], index: 3, kind: input, shape index: {}]
  %s4 = inlined_call_operand.vmem [shape: f32[1,32], index: 4, kind: input, shape index: {}]
  %s5 = inlined_call_operand.vmem [shape: f32[32,16], index: 5, kind: input, shape index: {}]
  %s6 = inlined_call_operand.vmem [shape: f32[1,16], index: 6, kind: input, shape index: {}]
  %s7 = inlined_call_operand.hbm [shape: f32[2,16], index: 7, kind: output, shape index: {}]
  %s8 = sld [smem:[#allocation0]]
  $region38: #{tpu_custom_call.1} parent=0
    _
  %s10 = ssub.s32 1, %s8
  %s11 = scalar_select 0, %s10, %s8
  $region1: #{tpu_custom_call.1} parent=0
    #allocation2 [shape = 'u8[1024]{0}', space=vmem, size = 0x400, scoped, tag = 'output window, operand 0, single buffered']
    #allocation3 [shape = 's32[1]{0}', space=sflag, size = 0x4, scoped, tag = 'scoped memory for tpu_custom_call.1']
    %12 = vsyncpa [#allocation3], 0
    // Predicated region
    $region2: #{tpu_custom_call.1} parent=1 // pred_check
      _
    $region3: #{tpu_custom_call.1} parent=1 // pred_check_branch
      %14 = sbr.rel (0) target = $region5
    $region4: #{tpu_custom_call.1} parent=1 // pred_region
      _
    $region5: #{tpu_custom_call.1} parent=1 // pred_fallthru
      _
    // Predicated region
    $region6: #{tpu_custom_call.1} parent=1 // pred_check
      _
    $region7: #{tpu_custom_call.1} parent=1 // pred_check_branch
      %16 = sbr.rel (0) target = $region9
    $region8: #{tpu_custom_call.1} parent=1 // pred_region
      _
    $region9: #{tpu_custom_call.1} parent=1 // pred_fallthru
      _
    // Predicated region
    $region10: #{tpu_custom_call.1} parent=1 // pred_check
      _
    $region11: #{tpu_custom_call.1} parent=1 // pred_check_branch
      %18 = sbr.rel (0) target = $region13
    $region12: #{tpu_custom_call.1} parent=1 // pred_region
      _
    $region13: #{tpu_custom_call.1} parent=1 // pred_fallthru
      _
    // Predicated region
    $region14: #{tpu_custom_call.1} parent=1 // pred_check
      _
    $region15: #{tpu_custom_call.1} parent=1 // pred_check_branch
      %20 = sbr.rel (0) target = $region17
    $region16: #{tpu_custom_call.1} parent=1 // pred_region
      _
    $region17: #{tpu_custom_call.1} parent=1 // pred_fallthru
      _
    // Predicated region
    $region18: #{tpu_custom_call.1} parent=1 // pred_check
      _
    $region19: #{tpu_custom_call.1} parent=1 // pred_check_branch
      %22 = sbr.rel (0) target = $region21
    $region20: #{tpu_custom_call.1} parent=1 // pred_region
      _
    $region21: #{tpu_custom_call.1} parent=1 // pred_fallthru
      _
    // Predicated region
    $region22: #{tpu_custom_call.1} parent=1 // pred_check
      _
    $region23: #{tpu_custom_call.1} parent=1 // pred_check_branch
      %24 = sbr.rel (0) target = $region25
    $region24: #{tpu_custom_call.1} parent=1 // pred_region
      _
    $region25: #{tpu_custom_call.1} parent=1 // pred_fallthru
      _
    // Predicated region
    $region26: #{tpu_custom_call.1} parent=1 // pred_check
      _
    $region27: #{tpu_custom_call.1} parent=1 // pred_check_branch
      %26 = sbr.rel (0) target = $region29
    $region28: #{tpu_custom_call.1} parent=1 // pred_region
      _
    $region29: #{tpu_custom_call.1} parent=1 // pred_fallthru
      _
    %v27 = vld [vmem:[%s0] sm:$0xff]
    %v28 = vld [vmem:[%s0 + $0x8] sm:$0xff]
    %v29 = vld [vmem:[%s1] sm:$0xff]
    %v30 = vld [vmem:[%s1 + $0x8] sm:$0xff]
    %v31 = vld [vmem:[%s1 + $0x10] sm:$0xff]
    %v32 = vld [vmem:[%s1 + $0x18] sm:$0xff]
    %v33 = vld [vmem:[%s1 + $0x20] sm:$0xff]
    %v34 = vld [vmem:[%s1 + $0x28] sm:$0xff]
    %v35 = vld [vmem:[%s1 + $0x30] sm:$0xff]
    %v36 = vld [vmem:[%s1 + $0x38] sm:$0xff]
    %v37 = vld [vmem:[%s1 + $0x40] sm:$0xff]
    %v38 = vld [vmem:[%s1 + $0x48] sm:$0xff]
    %v39 = vld [vmem:[%s1 + $0x50] sm:$0xff]
    %v40 = vld [vmem:[%s1 + $0x58] sm:$0xff]
    %v41 = vld [vmem:[%s1 + $0x60] sm:$0xff]
    %v42 = vld [vmem:[%s1 + $0x68] sm:$0xff]
    %v43 = vld [vmem:[%s1 + $0x70] sm:$0xff]
    %v44 = vld [vmem:[%s1 + $0x78] sm:$0xff]
    %v45 = vld [vmem:[%s1 + $0x80] sm:$0xff]
    %v46 = vld [vmem:[%s1 + $0x88] sm:$0xff]
    %v47 = vld [vmem:[%s1 + $0x90] sm:$0xff]
    %v48 = vld [vmem:[%s1 + $0x98] sm:$0xff]
    %v49 = vld [vmem:[%s1 + $0xa0] sm:$0xff]
    %v50 = vld [vmem:[%s1 + $0xa8] sm:$0xff]
    %v51 = vld [vmem:[%s1 + $0xb0] sm:$0xff]
    %v52 = vld [vmem:[%s1 + $0xb8] sm:$0xff]
    %v53 = vld [vmem:[%s1 + $0xc0] sm:$0xff]
    %v54 = vld [vmem:[%s1 + $0xc8] sm:$0xff]
    %v55 = vld [vmem:[%s1 + $0xd0] sm:$0xff]
    %v56 = vld [vmem:[%s1 + $0xd8] sm:$0xff]
    %v57 = vld [vmem:[%s1 + $0xe0] sm:$0xff]
    %v58 = vld [vmem:[%s1 + $0xe8] sm:$0xff]
    %v59 = vld [vmem:[%s1 + $0xf0] sm:$0xff]
    %v60 = vld [vmem:[%s1 + $0xf8] sm:$0xff]
    %v61 = vld [vmem:[%s1 + $0x100] sm:$0xff]
    %v62 = vld [vmem:[%s1 + $0x108] sm:$0xff]
    %v63 = vld [vmem:[%s1 + $0x110] sm:$0xff]
    %v64 = vld [vmem:[%s1 + $0x118] sm:$0xff]
    %v65 = vld [vmem:[%s1 + $0x120] sm:$0xff]
    %v66 = vld [vmem:[%s1 + $0x128] sm:$0xff]
    %v67 = vld [vmem:[%s1 + $0x130] sm:$0xff]
    %v68 = vld [vmem:[%s1 + $0x138] sm:$0xff]
    %v69 = vld [vmem:[%s1 + $0x140] sm:$0xff]
    %v70 = vld [vmem:[%s1 + $0x148] sm:$0xff]
    %v71 = vld [vmem:[%s1 + $0x150] sm:$0xff]
    %v72 = vld [vmem:[%s1 + $0x158] sm:$0xff]
    %v73 = vld [vmem:[%s1 + $0x160] sm:$0xff]
    %v74 = vld [vmem:[%s1 + $0x168] sm:$0xff]
    %v75 = vld [vmem:[%s1 + $0x170] sm:$0xff]
    %v76 = vld [vmem:[%s1 + $0x178] sm:$0xff]
    %v77 = vld [vmem:[%s1 + $0x180] sm:$0xff]
    %v78 = vld [vmem:[%s1 + $0x188] sm:$0xff]
    %v79 = vld [vmem:[%s1 + $0x190] sm:$0xff]
    %v80 = vld [vmem:[%s1 + $0x198] sm:$0xff]
    %v81 = vld [vmem:[%s1 + $0x1a0] sm:$0xff]
    %v82 = vld [vmem:[%s1 + $0x1a8] sm:$0xff]
    %v83 = vld [vmem:[%s1 + $0x1b0] sm:$0xff]
    %v84 = vld [vmem:[%s1 + $0x1b8] sm:$0xff]
    %v85 = vld [vmem:[%s1 + $0x1c0] sm:$0xff]
    %v86 = vld [vmem:[%s1 + $0x1c8] sm:$0xff]
    %v87 = vld [vmem:[%s1 + $0x1d0] sm:$0xff]
    %v88 = vld [vmem:[%s1 + $0x1d8] sm:$0xff]
    %v89 = vld [vmem:[%s1 + $0x1e0] sm:$0xff]
    %v90 = vld [vmem:[%s1 + $0x1e8] sm:$0xff]
    %v91 = vld [vmem:[%s1 + $0x1f0] sm:$0xff]
    %v92 = vld [vmem:[%s1 + $0x1f8] sm:$0xff]
    %v93 = vld [vmem:[%s1 + $0x200] sm:$0xff]
    %v94 = vld [vmem:[%s1 + $0x208] sm:$0xff]
    %v95 = vld [vmem:[%s1 + $0x210] sm:$0xff]
    %v96 = vld [vmem:[%s1 + $0x218] sm:$0xff]
    %v97 = vld [vmem:[%s1 + $0x220] sm:$0xff]
    %v98 = vld [vmem:[%s1 + $0x228] sm:$0xff]
    %v99 = vld [vmem:[%s1 + $0x230] sm:$0xff]
    %v100 = vld [vmem:[%s1 + $0x238] sm:$0xff]
    %v101 = vld [vmem:[%s1 + $0x240] sm:$0xff]
    %v102 = vld [vmem:[%s1 + $0x248] sm:$0xff]
    %v103 = vld [vmem:[%s1 + $0x250] sm:$0xff]
    %v104 = vld [vmem:[%s1 + $0x258] sm:$0xff]
    %v105 = vld [vmem:[%s1 + $0x260] sm:$0xff]
    %v106 = vld [vmem:[%s1 + $0x268] sm:$0xff]
    %v107 = vld [vmem:[%s1 + $0x270] sm:$0xff]
    %v108 = vld [vmem:[%s1 + $0x278] sm:$0xff]
    %v109 = vld [vmem:[%s1 + $0x280] sm:$0xff]
    %v110 = vld [vmem:[%s1 + $0x288] sm:$0xff]
    %v111 = vld [vmem:[%s1 + $0x290] sm:$0xff]
    %v112 = vld [vmem:[%s1 + $0x298] sm:$0xff]
    %v113 = vld [vmem:[%s1 + $0x2a0] sm:$0xff]
    %v114 = vld [vmem:[%s1 + $0x2a8] sm:$0xff]
    %v115 = vld [vmem:[%s1 + $0x2b0] sm:$0xff]
    %v116 = vld [vmem:[%s1 + $0x2b8] sm:$0xff]
    %v117 = vld [vmem:[%s1 + $0x2c0] sm:$0xff]
    %v118 = vld [vmem:[%s1 + $0x2c8] sm:$0xff]
    %v119 = vld [vmem:[%s1 + $0x2d0] sm:$0xff]
    %v120 = vld [vmem:[%s1 + $0x2d8] sm:$0xff]
    %v121 = vld [vmem:[%s1 + $0x2e0] sm:$0xff]
    %v122 = vld [vmem:[%s1 + $0x2e8] sm:$0xff]
    %v123 = vld [vmem:[%s1 + $0x2f0] sm:$0xff]
    %v124 = vld [vmem:[%s1 + $0x2f8] sm:$0xff]
    %v125 = vld [vmem:[%s1 + $0x300] sm:$0xff]
    %v126 = vld [vmem:[%s1 + $0x308] sm:$0xff]
    %v127 = vld [vmem:[%s1 + $0x310] sm:$0xff]
    %v128 = vld [vmem:[%s1 + $0x318] sm:$0xff]
    %v129 = vld [vmem:[%s1 + $0x320] sm:$0xff]
    %v130 = vld [vmem:[%s1 + $0x328] sm:$0xff]
    %v131 = vld [vmem:[%s1 + $0x330] sm:$0xff]
    %v132 = vld [vmem:[%s1 + $0x338] sm:$0xff]
    %v133 = vld [vmem:[%s1 + $0x340] sm:$0xff]
    %v134 = vld [vmem:[%s1 + $0x348] sm:$0xff]
    %v135 = vld [vmem:[%s1 + $0x350] sm:$0xff]
    %v136 = vld [vmem:[%s1 + $0x358] sm:$0xff]
    %v137 = vld [vmem:[%s1 + $0x360] sm:$0xff]
    %v138 = vld [vmem:[%s1 + $0x368] sm:$0xff]
    %v139 = vld [vmem:[%s1 + $0x370] sm:$0xff]
    %v140 = vld [vmem:[%s1 + $0x378] sm:$0xff]
    %v141 = vld [vmem:[%s1 + $0x380] sm:$0xff]
    %v142 = vld [vmem:[%s1 + $0x388] sm:$0xff]
    %v143 = vld [vmem:[%s1 + $0x390] sm:$0xff]
    %v144 = vld [vmem:[%s1 + $0x398] sm:$0xff]
    %v145 = vld [vmem:[%s1 + $0x3a0] sm:$0xff]
    %v146 = vld [vmem:[%s1 + $0x3a8] sm:$0xff]
    %v147 = vld [vmem:[%s1 + $0x3b0] sm:$0xff]
    %v148 = vld [vmem:[%s1 + $0x3b8] sm:$0xff]
    %v149 = vld [vmem:[%s1 + $0x3c0] sm:$0xff]
    %v150 = vld [vmem:[%s1 + $0x3c8] sm:$0xff]
    %v151 = vld [vmem:[%s1 + $0x3d0] sm:$0xff]
    %v152 = vld [vmem:[%s1 + $0x3d8] sm:$0xff]
    %v153 = vld [vmem:[%s1 + $0x3e0] sm:$0xff]
    %v154 = vld [vmem:[%s2] sm:$0x1]
    %v156 = vlaneseq
    %v157 = vshrl.u32 %v156, 7
    %v158 = vsub.s32 0, %v157
    %v159 = vrot.slane %v154, %v158
    %v163 = vcombine.high %v27, %v27
    %v165 = vunpack.c.l.s4 1983009808
    %v166 = vunpack.c.0.s8 %v165
    %v167 = vlaneseq
    %v168 = vshrl.u32 %v167, 7
    %v169 = vsub.s32 %v166, %v168
    %v170 = vrot.slane %v27, %v169
    %v172 = vunpack.c.l.s4 1983009808
    %v173 = vunpack.c.0.s8 %v172
    %v174 = vlaneseq
    %v175 = vshrl.u32 %v174, 7
    %v176 = vsub.s32 %v173, %v175
    %v177 = vrot.slane %v163, %v176
    %v178 = vcombine.high %v170, %v170
    %v179 = vcombine.high %v177, %v177
    %v180 = vcombine.high %v28, %v28
    %v182 = vunpack.c.l.s4 1983009808
    %v183 = vunpack.c.0.s8 %v182
    %v184 = vlaneseq
    %v185 = vshrl.u32 %v184, 7
    %v186 = vsub.s32 %v183, %v185
    %v187 = vrot.slane %v28, %v186
    %v189 = vunpack.c.l.s4 1983009808
    %v190 = vunpack.c.0.s8 %v189
    %v191 = vlaneseq
    %v192 = vshrl.u32 %v191, 7
    %v193 = vsub.s32 %v190, %v192
    %v194 = vrot.slane %v180, %v193
    %v195 = vcombine.high %v187, %v187
    %v196 = vcombine.high %v194, %v194
    %vm204 = vcmask 850944
    %v205 = vsel %vm204, %v196, 0
    %207 = vmatprep.subr.mxu0 0.0
    %208 = vmatpush1.msra.mxu0 %v44
    %209 = vmatprep.subr.mxu0 0.0
    %210 = vmatpush1.msra.mxu0 %v43
    %211 = vmatprep.subr.mxu0 0.0
    %212 = vmatpush1.msra.mxu0 %v42
    %213 = vmatprep.subr.mxu0 0.0
    %214 = vmatpush1.msra.mxu0 %v41
    %215 = vmatprep.subr.mxu0 0.0
    %216 = vmatpush1.msra.mxu0 %v40
    %217 = vmatprep.subr.mxu0 0.0
    %218 = vmatpush1.msra.mxu0 %v39
    %219 = vmatprep.subr.mxu0 0.0
    %220 = vmatpush1.msra.mxu0 %v38
    %221 = vmatprep.subr.mxu0 0.0
    %222 = vmatpush1.msra.mxu0 %v37
    %223 = vmatprep.subr.mxu0 0.0
    %224 = vmatpush1.msra.mxu0 %v36
    %225 = vmatprep.subr.mxu0 0.0
    %226 = vmatpush1.msra.mxu0 %v35
    %227 = vmatprep.subr.mxu0 0.0
    %228 = vmatpush1.msra.mxu0 %v34
    %229 = vmatprep.subr.mxu0 0.0
    %230 = vmatpush1.msra.mxu0 %v33
    %231 = vmatprep.subr.mxu0 0.0
    %232 = vmatpush1.msra.mxu0 %v32
    %233 = vmatprep.subr.mxu0 0.0
    %234 = vmatpush1.msra.mxu0 %v31
    %235 = vmatprep.subr.mxu0 0.0
    %236 = vmatpush1.msra.mxu0 %v30
    %237 = vmatprep.subr.mxu0 0.0
    %238 = vmatpush1.msra.mxu0 %v29
    %239 = vmatprep.subr.mxu0 0.0
    %240 = vmatpush2.msra.mxu0 %v60
    %241 = vmatprep.subr.mxu0 0.0
    %242 = vmatpush2.msra.mxu0 %v59
    %243 = vmatprep.subr.mxu0 0.0
    %244 = vmatpush2.msra.mxu0 %v58
    %245 = vmatprep.subr.mxu0 0.0
    %246 = vmatpush2.msra.mxu0 %v57
    %247 = vmatprep.subr.mxu0 0.0
    %248 = vmatpush2.msra.mxu0 %v56
    %249 = vmatprep.subr.mxu0 0.0
    %250 = vmatpush2.msra.mxu0 %v55
    %251 = vmatprep.subr.mxu0 0.0
    %252 = vmatpush2.msra.mxu0 %v54
    %253 = vmatprep.subr.mxu0 0.0
    %254 = vmatpush2.msra.mxu0 %v53
    %255 = vmatprep.subr.mxu0 0.0
    %256 = vmatpush2.msra.mxu0 %v52
    %257 = vmatprep.subr.mxu0 0.0
    %258 = vmatpush2.msra.mxu0 %v51
    %259 = vmatprep.subr.mxu0 0.0
    %260 = vmatpush2.msra.mxu0 %v50
    %261 = vmatprep.subr.mxu0 0.0
    %262 = vmatpush2.msra.mxu0 %v49
    %263 = vmatprep.subr.mxu0 0.0
    %264 = vmatpush2.msra.mxu0 %v48
    %265 = vmatprep.subr.mxu0 0.0
    %266 = vmatpush2.msra.mxu0 %v47
    %267 = vmatprep.subr.mxu0 0.0
    %268 = vmatpush2.msra.mxu0 %v46
    %269 = vmatprep.subr.mxu0 0.0
    %270 = vmatpush2.msra.mxu0 %v45
    %271 = vmatprep.mubr.f32.mxu0 %v178
    %272 = vmatmul.mubr.f32.gmra.mxu0 %v170
    %v273 = vpop.f32.mrf.mxu0
    %v274 = vadd.f32 %v159, %v273
    %v275 = vpop.f32.mrf.mxu0
    %276 = vdwg.mxu0
    %277 = vmatprep.subr.mxu0 0.0
    %278 = vmatpush1.msra.mxu0 %v76
    %279 = vmatprep.subr.mxu0 0.0
    %280 = vmatpush1.msra.mxu0 %v75
    %281 = vmatprep.subr.mxu0 0.0
    %282 = vmatpush1.msra.mxu0 %v74
    %283 = vmatprep.subr.mxu0 0.0
    %284 = vmatpush1.msra.mxu0 %v73
    %285 = vmatprep.subr.mxu0 0.0
    %286 = vmatpush1.msra.mxu0 %v72
    %287 = vmatprep.subr.mxu0 0.0
    %288 = vmatpush1.msra.mxu0 %v71
    %289 = vmatprep.subr.mxu0 0.0
    %290 = vmatpush1.msra.mxu0 %v70
    %291 = vmatprep.subr.mxu0 0.0
    %292 = vmatpush1.msra.mxu0 %v69
    %293 = vmatprep.subr.mxu0 0.0
    %294 = vmatpush1.msra.mxu0 %v68
    %295 = vmatprep.subr.mxu0 0.0
    %296 = vmatpush1.msra.mxu0 %v67
    %297 = vmatprep.subr.mxu0 0.0
    %298 = vmatpush1.msra.mxu0 %v66
    %299 = vmatprep.subr.mxu0 0.0
    %300 = vmatpush1.msra.mxu0 %v65
    %301 = vmatprep.subr.mxu0 0.0
    %302 = vmatpush1.msra.mxu0 %v64
    %303 = vmatprep.subr.mxu0 0.0
    %304 = vmatpush1.msra.mxu0 %v63
    %305 = vmatprep.subr.mxu0 0.0
    %306 = vmatpush1.msra.mxu0 %v62
    %307 = vmatprep.subr.mxu0 0.0
    %308 = vmatpush1.msra.mxu0 %v61
    %309 = vmatprep.subr.mxu0 0.0
    %310 = vmatpush2.msra.mxu0 %v92
    %311 = vmatprep.subr.mxu0 0.0
    %312 = vmatpush2.msra.mxu0 %v91
    %313 = vmatprep.subr.mxu0 0.0
    %314 = vmatpush2.msra.mxu0 %v90
    %315 = vmatprep.subr.mxu0 0.0
    %316 = vmatpush2.msra.mxu0 %v89
    %317 = vmatprep.subr.mxu0 0.0
    %318 = vmatpush2.msra.mxu0 %v88
    %319 = vmatprep.subr.mxu0 0.0
    %320 = vmatpush2.msra.mxu0 %v87
    %321 = vmatprep.subr.mxu0 0.0
    %322 = vmatpush2.msra.mxu0 %v86
    %323 = vmatprep.subr.mxu0 0.0
    %324 = vmatpush2.msra.mxu0 %v85
    %325 = vmatprep.subr.mxu0 0.0
    %326 = vmatpush2.msra.mxu0 %v84
    %327 = vmatprep.subr.mxu0 0.0
    %328 = vmatpush2.msra.mxu0 %v83
    %329 = vmatprep.subr.mxu0 0.0
    %330 = vmatpush2.msra.mxu0 %v82
    %331 = vmatprep.subr.mxu0 0.0
    %332 = vmatpush2.msra.mxu0 %v81
    %333 = vmatprep.subr.mxu0 0.0
    %334 = vmatpush2.msra.mxu0 %v80
    %335 = vmatprep.subr.mxu0 0.0
    %336 = vmatpush2.msra.mxu0 %v79
    %337 = vmatprep.subr.mxu0 0.0
    %338 = vmatpush2.msra.mxu0 %v78
    %339 = vmatprep.subr.mxu0 0.0
    %340 = vmatpush2.msra.mxu0 %v77
    %341 = vmatprep.mubr.f32.mxu0 %v179
    %342 = vmatmul.mubr.f32.gmra.mxu0 %v177
    %v343 = vpop.f32.mrf.mxu0
    %v344 = vadd.f32 %v274, %v343
    %v345 = vpop.f32.mrf.mxu0
    %346 = vdwg.mxu0
    %347 = vmatprep.subr.mxu0 0.0
    %348 = vmatpush1.msra.mxu0 %v108
    %349 = vmatprep.subr.mxu0 0.0
    %350 = vmatpush1.msra.mxu0 %v107
    %351 = vmatprep.subr.mxu0 0.0
    %352 = vmatpush1.msra.mxu0 %v106
    %353 = vmatprep.subr.mxu0 0.0
    %354 = vmatpush1.msra.mxu0 %v105
    %355 = vmatprep.subr.mxu0 0.0
    %356 = vmatpush1.msra.mxu0 %v104
    %357 = vmatprep.subr.mxu0 0.0
    %358 = vmatpush1.msra.mxu0 %v103
    %359 = vmatprep.subr.mxu0 0.0
    %360 = vmatpush1.msra.mxu0 %v102
    %361 = vmatprep.subr.mxu0 0.0
    %362 = vmatpush1.msra.mxu0 %v101
    %363 = vmatprep.subr.mxu0 0.0
    %364 = vmatpush1.msra.mxu0 %v100
    %365 = vmatprep.subr.mxu0 0.0
    %366 = vmatpush1.msra.mxu0 %v99
    %367 = vmatprep.subr.mxu0 0.0
    %368 = vmatpush1.msra.mxu0 %v98
    %369 = vmatprep.subr.mxu0 0.0
    %370 = vmatpush1.msra.mxu0 %v97
    %371 = vmatprep.subr.mxu0 0.0
    %372 = vmatpush1.msra.mxu0 %v96
    %373 = vmatprep.subr.mxu0 0.0
    %374 = vmatpush1.msra.mxu0 %v95
    %375 = vmatprep.subr.mxu0 0.0
    %376 = vmatpush1.msra.mxu0 %v94
    %377 = vmatprep.subr.mxu0 0.0
    %378 = vmatpush1.msra.mxu0 %v93
    %379 = vmatprep.subr.mxu0 0.0
    %380 = vmatpush2.msra.mxu0 %v124
    %381 = vmatprep.subr.mxu0 0.0
    %382 = vmatpush2.msra.mxu0 %v123
    %383 = vmatprep.subr.mxu0 0.0
    %384 = vmatpush2.msra.mxu0 %v122
    %385 = vmatprep.subr.mxu0 0.0
    %386 = vmatpush2.msra.mxu0 %v121
    %387 = vmatprep.subr.mxu0 0.0
    %388 = vmatpush2.msra.mxu0 %v120
    %389 = vmatprep.subr.mxu0 0.0
    %390 = vmatpush2.msra.mxu0 %v119
    %391 = vmatprep.subr.mxu0 0.0
    %392 = vmatpush2.msra.mxu0 %v118
    %393 = vmatprep.subr.mxu0 0.0
    %394 = vmatpush2.msra.mxu0 %v117
    %395 = vmatprep.subr.mxu0 0.0
    %396 = vmatpush2.msra.mxu0 %v116
    %397 = vmatprep.subr.mxu0 0.0
    %398 = vmatpush2.msra.mxu0 %v115
    %399 = vmatprep.subr.mxu0 0.0
    %400 = vmatpush2.msra.mxu0 %v114
    %401 = vmatprep.subr.mxu0 0.0
    %402 = vmatpush2.msra.mxu0 %v113
    %403 = vmatprep.subr.mxu0 0.0
    %404 = vmatpush2.msra.mxu0 %v112
    %405 = vmatprep.subr.mxu0 0.0
    %406 = vmatpush2.msra.mxu0 %v111
    %407 = vmatprep.subr.mxu0 0.0
    %408 = vmatpush2.msra.mxu0 %v110
    %409 = vmatprep.subr.mxu0 0.0
    %410 = vmatpush2.msra.mxu0 %v109
    %411 = vmatprep.mubr.f32.mxu0 %v195
    %412 = vmatmul.mubr.f32.gmra.mxu0 %v187
    %v413 = vpop.f32.mrf.mxu0
    %v414 = vadd.f32 %v344, %v413
    %v415 = vpop.f32.mrf.mxu0
    %416 = vdwg.mxu0
    %417 = vmatprep.subr.mxu0 0.0
    %418 = vmatpush1.msra.mxu0 %v140
    %419 = vmatprep.subr.mxu0 0.0
    %420 = vmatpush1.msra.mxu0 %v139
    %421 = vmatprep.subr.mxu0 0.0
    %422 = vmatpush1.msra.mxu0 %v138
    %423 = vmatprep.subr.mxu0 0.0
    %424 = vmatpush1.msra.mxu0 %v137
    %425 = vmatprep.subr.mxu0 0.0
    %426 = vmatpush1.msra.mxu0 %v136
    %427 = vmatprep.subr.mxu0 0.0
    %428 = vmatpush1.msra.mxu0 %v135
    %429 = vmatprep.subr.mxu0 0.0
    %430 = vmatpush1.msra.mxu0 %v134
    %431 = vmatprep.subr.mxu0 0.0
    %432 = vmatpush1.msra.mxu0 %v133
    %433 = vmatprep.subr.mxu0 0.0
    %434 = vmatpush1.msra.mxu0 %v132
    %435 = vmatprep.subr.mxu0 0.0
    %436 = vmatpush1.msra.mxu0 %v131
    %437 = vmatprep.subr.mxu0 0.0
    %438 = vmatpush1.msra.mxu0 %v130
    %439 = vmatprep.subr.mxu0 0.0
    %440 = vmatpush1.msra.mxu0 %v129
    %441 = vmatprep.subr.mxu0 0.0
    %442 = vmatpush1.msra.mxu0 %v128
    %443 = vmatprep.subr.mxu0 0.0
    %444 = vmatpush1.msra.mxu0 %v127
    %445 = vmatprep.subr.mxu0 0.0
    %446 = vmatpush1.msra.mxu0 %v126
    %447 = vmatprep.subr.mxu0 0.0
    %448 = vmatpush1.msra.mxu0 %v125
    %449 = vmatprep.subr.mxu0 0.0
    %450 = vmatpush2.msra.mxu0 0.0
    %451 = vmatprep.subr.mxu0 0.0
    %452 = vmatpush2.msra.mxu0 0.0
    %453 = vmatprep.subr.mxu0 0.0
    %454 = vmatpush2.msra.mxu0 0.0
    %455 = vmatprep.subr.mxu0 0.0
    %456 = vmatpush2.msra.mxu0 %v153
    %457 = vmatprep.subr.mxu0 0.0
    %458 = vmatpush2.msra.mxu0 %v152
    %459 = vmatprep.subr.mxu0 0.0
    %460 = vmatpush2.msra.mxu0 %v151
    %461 = vmatprep.subr.mxu0 0.0
    %462 = vmatpush2.msra.mxu0 %v150
    %463 = vmatprep.subr.mxu0 0.0
    %464 = vmatpush2.msra.mxu0 %v149
    %465 = vmatprep.subr.mxu0 0.0
    %466 = vmatpush2.msra.mxu0 %v148
    %467 = vmatprep.subr.mxu0 0.0
    %468 = vmatpush2.msra.mxu0 %v147
    %469 = vmatprep.subr.mxu0 0.0
    %470 = vmatpush2.msra.mxu0 %v146
    %471 = vmatprep.subr.mxu0 0.0
    %472 = vmatpush2.msra.mxu0 %v145
    %473 = vmatprep.subr.mxu0 0.0
    %474 = vmatpush2.msra.mxu0 %v144
    %475 = vmatprep.subr.mxu0 0.0
    %476 = vmatpush2.msra.mxu0 %v143
    %477 = vmatprep.subr.mxu0 0.0
    %478 = vmatpush2.msra.mxu0 %v142
    %479 = vmatprep.subr.mxu0 0.0
    %480 = vmatpush2.msra.mxu0 %v141
    %481 = vmatprep.mubr.f32.mxu0 %v205
    %482 = vmatmul.mubr.f32.gmra.mxu0 %v194
    %v483 = vpop.f32.mrf.mxu0
    %v484 = vadd.f32 %v414, %v483
    %v485 = vpop.f32.mrf.mxu0
    %486 = vdwg.mxu0
    %v487 = vmax.f32 %v484, 0.0
    %v488 = vld [vmem:[%s3] sm:$0xff]
    %v489 = vld [vmem:[%s3 + $0x8] sm:$0xff]
    %v490 = vld [vmem:[%s3 + $0x10] sm:$0xff]
    %v491 = vld [vmem:[%s3 + $0x18] sm:$0xff]
    %v492 = vld [vmem:[%s3 + $0x20] sm:$0xff]
    %v493 = vld [vmem:[%s3 + $0x28] sm:$0xff]
    %v494 = vld [vmem:[%s3 + $0x30] sm:$0xff]
    %v495 = vld [vmem:[%s3 + $0x38] sm:$0xff]
    %v496 = vld [vmem:[%s4] sm:$0x1]
    %v498 = vlaneseq
    %v499 = vshrl.u32 %v498, 7
    %v500 = vsub.s32 0, %v499
    %v501 = vrot.slane %v496, %v500
    %vm503 = vcmask 523264
    %v505 = vsel %vm503, %v487, 0
    %507 = vmatprep.subr.mxu0 0.0
    %508 = vmatpush1.msra.mxu0 0.0
    %509 = vmatprep.subr.mxu0 0.0
    %510 = vmatpush1.msra.mxu0 0.0
    %511 = vmatprep.subr.mxu0 0.0
    %512 = vmatpush1.msra.mxu0 0.0
    %513 = vmatprep.subr.mxu0 0.0
    %514 = vmatpush1.msra.mxu0 0.0
    %515 = vmatprep.subr.mxu0 0.0
    %516 = vmatpush1.msra.mxu0 0.0
    %517 = vmatprep.subr.mxu0 0.0
    %518 = vmatpush1.msra.mxu0 0.0
    %519 = vmatprep.subr.mxu0 0.0
    %520 = vmatpush1.msra.mxu0 0.0
    %521 = vmatprep.subr.mxu0 0.0
    %522 = vmatpush1.msra.mxu0 0.0
    %523 = vmatprep.subr.mxu0 0.0
    %524 = vmatpush1.msra.mxu0 %v495
    %525 = vmatprep.subr.mxu0 0.0
    %526 = vmatpush1.msra.mxu0 %v494
    %527 = vmatprep.subr.mxu0 0.0
    %528 = vmatpush1.msra.mxu0 %v493
    %529 = vmatprep.subr.mxu0 0.0
    %530 = vmatpush1.msra.mxu0 %v492
    %531 = vmatprep.subr.mxu0 0.0
    %532 = vmatpush1.msra.mxu0 %v491
    %533 = vmatprep.subr.mxu0 0.0
    %534 = vmatpush1.msra.mxu0 %v490
    %535 = vmatprep.subr.mxu0 0.0
    %536 = vmatpush1.msra.mxu0 %v489
    %537 = vmatprep.subr.mxu0 0.0
    %538 = vmatpush1.msra.mxu0 %v488
    %539 = vmatprep.subr.mxu0 0.0
    %540 = vmatpush2.msra.mxu0 0.0
    %541 = vmatprep.subr.mxu0 0.0
    %542 = vmatpush2.msra.mxu0 0.0
    %543 = vmatprep.subr.mxu0 0.0
    %544 = vmatpush2.msra.mxu0 0.0
    %545 = vmatprep.subr.mxu0 0.0
    %546 = vmatpush2.msra.mxu0 0.0
    %547 = vmatprep.subr.mxu0 0.0
    %548 = vmatpush2.msra.mxu0 0.0
    %549 = vmatprep.subr.mxu0 0.0
    %550 = vmatpush2.msra.mxu0 0.0
    %551 = vmatprep.subr.mxu0 0.0
    %552 = vmatpush2.msra.mxu0 0.0
    %553 = vmatprep.subr.mxu0 0.0
    %554 = vmatpush2.msra.mxu0 0.0
    %555 = vmatprep.subr.mxu0 0.0
    %556 = vmatpush2.msra.mxu0 0.0
    %557 = vmatprep.subr.mxu0 0.0
    %558 = vmatpush2.msra.mxu0 0.0
    %559 = vmatprep.subr.mxu0 0.0
    %560 = vmatpush2.msra.mxu0 0.0
    %561 = vmatprep.subr.mxu0 0.0
    %562 = vmatpush2.msra.mxu0 0.0
    %563 = vmatprep.subr.mxu0 0.0
    %564 = vmatpush2.msra.mxu0 0.0
    %565 = vmatprep.subr.mxu0 0.0
    %566 = vmatpush2.msra.mxu0 0.0
    %567 = vmatprep.subr.mxu0 0.0
    %568 = vmatpush2.msra.mxu0 0.0
    %569 = vmatprep.subr.mxu0 0.0
    %570 = vmatpush2.msra.mxu0 0.0
    %571 = vmatprep.mubr.f32.mxu0 0.0
    %572 = vmatmul.mubr.f32.gmra.mxu0 %v505
    %v573 = vpop.f32.mrf.mxu0
    %v574 = vadd.f32 %v501, %v573
    %v575 = vpop.f32.mrf.mxu0
    %576 = vdwg.mxu0
    %v577 = vmax.f32 %v574, 0.0
    %v578 = vld [vmem:[%s5] sm:$0xff]
    %v579 = vld [vmem:[%s5 + $0x8] sm:$0xff]
    %v580 = vld [vmem:[%s5 + $0x10] sm:$0xff]
    %v581 = vld [vmem:[%s5 + $0x18] sm:$0xff]
    %v582 = vld [vmem:[%s6] sm:$0x1]
    %v584 = vlaneseq
    %v585 = vshrl.u32 %v584, 7
    %v586 = vsub.s32 0, %v585
    %v587 = vrot.slane %v582, %v586
    %vm589 = vcmask 261120
    %v591 = vsel %vm589, %v577, 0
    %593 = vmatprep.subr.mxu0 0.0
    %594 = vmatpush1.msra.mxu0 0.0
    %595 = vmatprep.subr.mxu0 0.0
    %596 = vmatpush1.msra.mxu0 0.0
    %597 = vmatprep.subr.mxu0 0.0
    %598 = vmatpush1.msra.mxu0 0.0
    %599 = vmatprep.subr.mxu0 0.0
    %600 = vmatpush1.msra.mxu0 0.0
    %601 = vmatprep.subr.mxu0 0.0
    %602 = vmatpush1.msra.mxu0 0.0
    %603 = vmatprep.subr.mxu0 0.0
    %604 = vmatpush1.msra.mxu0 0.0
    %605 = vmatprep.subr.mxu0 0.0
    %606 = vmatpush1.msra.mxu0 0.0
    %607 = vmatprep.subr.mxu0 0.0
    %608 = vmatpush1.msra.mxu0 0.0
    %609 = vmatprep.subr.mxu0 0.0
    %610 = vmatpush1.msra.mxu0 0.0
    %611 = vmatprep.subr.mxu0 0.0
    %612 = vmatpush1.msra.mxu0 0.0
    %613 = vmatprep.subr.mxu0 0.0
    %614 = vmatpush1.msra.mxu0 0.0
    %615 = vmatprep.subr.mxu0 0.0
    %616 = vmatpush1.msra.mxu0 0.0
    %617 = vmatprep.subr.mxu0 0.0
    %618 = vmatpush1.msra.mxu0 %v581
    %619 = vmatprep.subr.mxu0 0.0
    %620 = vmatpush1.msra.mxu0 %v580
    %621 = vmatprep.subr.mxu0 0.0
    %622 = vmatpush1.msra.mxu0 %v579
    %623 = vmatprep.subr.mxu0 0.0
    %624 = vmatpush1.msra.mxu0 %v578
    %625 = vmatprep.subr.mxu0 0.0
    %626 = vmatpush2.msra.mxu0 0.0
    %627 = vmatprep.subr.mxu0 0.0
    %628 = vmatpush2.msra.mxu0 0.0
    %629 = vmatprep.subr.mxu0 0.0
    %630 = vmatpush2.msra.mxu0 0.0
    %631 = vmatprep.subr.mxu0 0.0
    %632 = vmatpush2.msra.mxu0 0.0
    %633 = vmatprep.subr.mxu0 0.0
    %634 = vmatpush2.msra.mxu0 0.0
    %635 = vmatprep.subr.mxu0 0.0
    %636 = vmatpush2.msra.mxu0 0.0
    %637 = vmatprep.subr.mxu0 0.0
    %638 = vmatpush2.msra.mxu0 0.0
    %639 = vmatprep.subr.mxu0 0.0
    %640 = vmatpush2.msra.mxu0 0.0
    %641 = vmatprep.subr.mxu0 0.0
    %642 = vmatpush2.msra.mxu0 0.0
    %643 = vmatprep.subr.mxu0 0.0
    %644 = vmatpush2.msra.mxu0 0.0
    %645 = vmatprep.subr.mxu0 0.0
    %646 = vmatpush2.msra.mxu0 0.0
    %647 = vmatprep.subr.mxu0 0.0
    %648 = vmatpush2.msra.mxu0 0.0
    %649 = vmatprep.subr.mxu0 0.0
    %650 = vmatpush2.msra.mxu0 0.0
    %651 = vmatprep.subr.mxu0 0.0
    %652 = vmatpush2.msra.mxu0 0.0
    %653 = vmatprep.subr.mxu0 0.0
    %654 = vmatpush2.msra.mxu0 0.0
    %655 = vmatprep.subr.mxu0 0.0
    %656 = vmatpush2.msra.mxu0 0.0
    %657 = vmatprep.mubr.f32.mxu0 0.0
    %658 = vmatmul.mubr.f32.gmra.mxu0 %v591
    %v659 = vpop.f32.mrf.mxu0
    %v660 = vadd.f32 %v587, %v659
    %v661 = vpop.f32.mrf.mxu0
    %662 = vdwg.mxu0
    %vm663 = vcmask 123904
    %664 = vst.msk [vmem:[#allocation2] sm:$0x3] %vm663, %v660
    // Predicated region
    $region30: #{tpu_custom_call.1} parent=1 // pred_check
      _
    $region31: #{tpu_custom_call.1} parent=1 // pred_check_branch
      %666 = sbr.rel (0) target = $region33
    $region32: #{tpu_custom_call.1} parent=1 // pred_region
      %s668 = ssub.s32 32, 32
      %669 = vsyncadd [#allocation3], %s668
      %s671 = sshll.u32 [#allocation2], 4
      %s672 = int_to_ptr.vmem [resolvable:$true] %s671
      %674 = dma.vmem_to_hbm [thread:$0]  %s672, 32, %s7, [#allocation3]
    $region33: #{tpu_custom_call.1} parent=1 // pred_fallthru
      _
    // Predicated region
    $region34: #{tpu_custom_call.1} parent=1 // pred_check
      _
    $region35: #{tpu_custom_call.1} parent=1 // pred_check_branch
      %676 = sbr.rel (0) target = $region37
    $region36: #{tpu_custom_call.1} parent=1 // pred_region
      %677 = dma.done [#allocation3], 32
    $region37: #{tpu_custom_call.1} parent=1 // pred_fallthru
      _
    %678 = vsyncpa [#allocation3], 1

</llo_original>
